<compile_context>
chip_gen: v5e
topology: v5e:2x2
jax: 0.10.0
libtpu: 0.0.40
codegen_flags: <defaults>
</compile_context>

<pallas_src>
import functools

import jax
import jax.numpy as jnp
from jax.experimental import pallas as pl
from jax.experimental.pallas import tpu as pltpu


def _round_up(n, m):
    return ((n + m - 1) // m) * m


def _mlp_kernel(num_hidden, x_ref, *refs):
    """Forward pass for one batch tile, activations stored (features, batch).

    refs = (w0T, b0T, [wT_h, bT_h] * num_hidden, woutT, boutT, o_ref)

    Weights are pre-transposed / zero-padded by the wrapper: wT has shape
    (out_features_padded, in_features_padded); biases are (out_features_padded, 1)
    and broadcast along the batch lanes.  Matches the PyTorch ordering:
        Linear(2, N)                       -- NO activation after it
        [Linear(N, N), Tanh()] * num_hidden
        Linear(N, 3)
    """
    o_ref = refs[-1]
    params = refs[:-1]

    # First linear (no tanh after it, matching nn.Sequential ordering).
    w0, b0 = params[0], params[1]
    h = jnp.dot(w0[...], x_ref[...], preferred_element_type=jnp.float32) + b0[...]

    # Hidden blocks: Linear -> Tanh.  Contraction dim is the padded hidden
    # width (128) -> good MXU utilization; tanh goes to the EUP.
    for li in range(num_hidden):
        w = params[2 + 2 * li]
        b = params[3 + 2 * li]
        h = jnp.tanh(
            jnp.dot(w[...], h, preferred_element_type=jnp.float32) + b[...]
        )

    # Output linear.
    w_out, b_out = params[-2], params[-1]
    o_ref[...] = (
        jnp.dot(w_out[...], h, preferred_element_type=jnp.float32) + b_out[...]
    )


def mlp_forward(x, params, *, num_hidden, bt=512):
    """x: (B, 2) float32.  params: flat list [w0 (2,N), b0 (1,N), ...,
    w_out (N,3), b_out (1,3)] (weights stored (in, out)).  Returns (B, 3)."""
    B, in_dim = x.shape
    N = params[0].shape[1]
    out_dim = params[-1].shape[1]

    # Padded feature dims: lane/MXU-friendly hidden width, sublane-aligned ends.
    in_p = _round_up(in_dim, 8)
    hid_p = _round_up(max(N, 128), 128)
    out_p = _round_up(out_dim, 8)

    # Batch tile: lane-dense (multiple of 128); pad batch so the grid covers
    # everything (no silently dropped rows).  Padded columns are zeros and are
    # sliced off at the end.
    bt = max(128, min(_round_up(bt, 128), _round_up(B, 128)))
    Bp = pl.cdiv(B, bt) * bt
    grid = (Bp // bt,)

    # ---- transposed, zero-padded operands: (features, batch) ----
    xT = jnp.zeros((in_p, Bp), jnp.float32).at[:in_dim, :B].set(x.T)

    def pad_wT(w, rows_p, cols_p):
        # w: (in, out) -> wT padded to (rows_p, cols_p) = (out_p, in_p)
        return (
            jnp.zeros((rows_p, cols_p), jnp.float32)
            .at[: w.shape[1], : w.shape[0]]
            .set(w.T)
        )

    def pad_bT(b, rows_p):
        # b: (1, out) -> (rows_p, 1)
        return jnp.zeros((rows_p, 1), jnp.float32).at[: b.shape[1], :].set(b.T)

    prepped = [pad_wT(params[0], hid_p, in_p), pad_bT(params[1], hid_p)]
    for li in range(num_hidden):
        prepped.append(pad_wT(params[2 + 2 * li], hid_p, hid_p))
        prepped.append(pad_bT(params[3 + 2 * li], hid_p))
    prepped.append(pad_wT(params[-2], out_p, hid_p))
    prepped.append(pad_bT(params[-1], out_p))

    # x/out tiles march along the batch (lane) axis; weights use a constant
    # index_map so they stay resident in VMEM across all grid steps.
    in_specs = [pl.BlockSpec((in_p, bt), lambda i: (0, i))]
    for p in prepped:
        in_specs.append(pl.BlockSpec(p.shape, lambda i: (0, 0)))
    out_specs = pl.BlockSpec((out_p, bt), lambda i: (0, i))

    kernel = functools.partial(_mlp_kernel, num_hidden)

    outT = pl.pallas_call(
        kernel,
        out_shape=jax.ShapeDtypeStruct((out_p, Bp), jnp.float32),
        grid_spec=pltpu.PrefetchScalarGridSpec(
            num_scalar_prefetch=0,
            grid=grid,
            in_specs=in_specs,
            out_specs=out_specs,
        ),
        compiler_params=pltpu.CompilerParams(
            dimension_semantics=("parallel",),
        ),
    )(xT, *prepped)

    return outT[:out_dim, :B].T


def init_params(key, num_layers, num_neurons):
    """Deterministic parameter init matching the PyTorch module's shapes."""
    dims = [(2, num_neurons)]
    for _ in range(num_layers - 1):
        dims.append((num_neurons, num_neurons))
    dims.append((num_neurons, 3))

    params = []
    for (din, dout) in dims:
        key, kw, kb = jax.random.split(key, 3)
        bound = 1.0 / jnp.sqrt(jnp.float32(din))  # PyTorch Linear default range
        w = jax.random.uniform(kw, (din, dout), jnp.float32, -bound, bound)
        b = jax.random.uniform(kb, (1, dout), jnp.float32, -bound, bound)
        params += [w, b]
    return params


def mlp_reference(x, params, *, num_hidden):
    """Pure-JAX reference for correctness checking."""
    h = x @ params[0] + params[1]
    for li in range(num_hidden):
        h = jnp.tanh(h @ params[2 + 2 * li] + params[3 + 2 * li])
    return h @ params[-2] + params[-1]


if __name__ == "__main__":
    num_layers = 3          # 1 input linear, 2 (linear+tanh) blocks, 1 output linear
    num_neurons = 32
    num_hidden = num_layers - 1

    key = jax.random.PRNGKey(0)
    key, kp = jax.random.split(key)
    params = init_params(kp, num_layers, num_neurons)

    # Small canonical case (matches the PyTorch module's (B, 2) input).
    key, kx = jax.random.split(key)
    x_small = jax.random.normal(kx, (8, 2), jnp.float32)
    out_small = jax.block_until_ready(
        mlp_forward(x_small, params, num_hidden=num_hidden)
    )
    ref_small = mlp_reference(x_small, params, num_hidden=num_hidden)
    assert out_small.shape == (8, 3), out_small.shape
    assert jnp.allclose(out_small, ref_small, atol=1e-5, rtol=1e-5), (
        float(jnp.max(jnp.abs(out_small - ref_small)))
    )

    # Non-aligned batch: exercises the cdiv padding / tail handling.
    key, kx2 = jax.random.split(key)
    x_odd = jax.random.normal(kx2, (257, 2), jnp.float32)
    out_odd = jax.block_until_ready(
        mlp_forward(x_odd, params, num_hidden=num_hidden)
    )
    ref_odd = mlp_reference(x_odd, params, num_hidden=num_hidden)
    assert out_odd.shape == (257, 3), out_odd.shape
    assert jnp.allclose(out_odd, ref_odd, atol=1e-5, rtol=1e-5), (
        float(jnp.max(jnp.abs(out_odd - ref_odd)))
    )

    print("KERNEL_OK")
</pallas_src>

<mosaic_0001>
module attributes {stable_mosaic.version = 11 : i64} {
  func.func @_mlp_kernel(%arg0: i32, %arg1: memref<8x128xf32, #tpu.memory_space<vmem>>, %arg2: memref<128x8xf32, #tpu.memory_space<vmem>>, %arg3: memref<128x1xf32, #tpu.memory_space<vmem>>, %arg4: memref<128x128xf32, #tpu.memory_space<vmem>>, %arg5: memref<128x1xf32, #tpu.memory_space<vmem>>, %arg6: memref<128x128xf32, #tpu.memory_space<vmem>>, %arg7: memref<128x1xf32, #tpu.memory_space<vmem>>, %arg8: memref<8x128xf32, #tpu.memory_space<vmem>>, %arg9: memref<8x1xf32, #tpu.memory_space<vmem>>, %arg10: memref<8x128xf32, #tpu.memory_space<vmem>>) attributes {dimension_semantics = [#tpu.dimension_semantics<parallel>], iteration_bounds = array<i64: 1>, scalar_prefetch = 0 : i64, scratch_operands = 0 : i64, tpu.core_type = #tpu.core_type<tc>, window_params = [{transform_indices = @transform_0, window_bounds = array<i64: 8, 128>}, {pipeline_mode = #tpu.pipeline_mode<synchronous>, transform_indices = @transform_1, window_bounds = array<i64: 128, 8>}, {pipeline_mode = #tpu.pipeline_mode<synchronous>, transform_indices = @transform_2, window_bounds = array<i64: 128, 1>}, {pipeline_mode = #tpu.pipeline_mode<synchronous>, transform_indices = @transform_3, window_bounds = array<i64: 128, 128>}, {pipeline_mode = #tpu.pipeline_mode<synchronous>, transform_indices = @transform_4, window_bounds = array<i64: 128, 1>}, {pipeline_mode = #tpu.pipeline_mode<synchronous>, transform_indices = @transform_5, window_bounds = array<i64: 128, 128>}, {pipeline_mode = #tpu.pipeline_mode<synchronous>, transform_indices = @transform_6, window_bounds = array<i64: 128, 1>}, {pipeline_mode = #tpu.pipeline_mode<synchronous>, transform_indices = @transform_7, window_bounds = array<i64: 8, 128>}, {pipeline_mode = #tpu.pipeline_mode<synchronous>, transform_indices = @transform_8, window_bounds = array<i64: 8, 1>}, {transform_indices = @transform_9, window_bounds = array<i64: 8, 128>}]} {
    %c0 = arith.constant 0 : index
    %c0_0 = arith.constant 0 : index
    %0 = vector.load %arg2[%c0, %c0_0] : memref<128x8xf32, #tpu.memory_space<vmem>>, vector<128x8xf32>
    %c0_1 = arith.constant 0 : index
    %c0_2 = arith.constant 0 : index
    %1 = vector.load %arg1[%c0_1, %c0_2] : memref<8x128xf32, #tpu.memory_space<vmem>>, vector<8x128xf32>
    %cst = arith.constant dense<0.000000e+00> : vector<128x128xf32>
    %2 = tpu.matmul %0, %1, %cst {dimension_numbers = #tpu.dot_dimension_numbers<[1], [0], [0], [1], [0, 0, 1, 1], [], []>} : vector<128x8xf32>, vector<8x128xf32>, vector<128x128xf32> -> vector<128x128xf32>
    %c0_3 = arith.constant 0 : index
    %c0_4 = arith.constant 0 : index
    %3 = vector.load %arg3[%c0_3, %c0_4] : memref<128x1xf32, #tpu.memory_space<vmem>>, vector<128x1xf32>
    %4 = vector.broadcast %3 : vector<128x1xf32> to vector<128x128xf32>
    %5 = arith.addf %2, %4 : vector<128x128xf32>
    %c0_5 = arith.constant 0 : index
    %c0_6 = arith.constant 0 : index
    %6 = vector.load %arg4[%c0_5, %c0_6] : memref<128x128xf32, #tpu.memory_space<vmem>>, vector<128x128xf32>
    %cst_7 = arith.constant dense<0.000000e+00> : vector<128x128xf32>
    %7 = tpu.matmul %6, %5, %cst_7 {dimension_numbers = #tpu.dot_dimension_numbers<[1], [0], [0], [1], [0, 0, 1, 1], [], []>} : vector<128x128xf32>, vector<128x128xf32>, vector<128x128xf32> -> vector<128x128xf32>
    %c0_8 = arith.constant 0 : index
    %c0_9 = arith.constant 0 : index
    %8 = vector.load %arg5[%c0_8, %c0_9] : memref<128x1xf32, #tpu.memory_space<vmem>>, vector<128x1xf32>
    %9 = vector.broadcast %8 : vector<128x1xf32> to vector<128x128xf32>
    %10 = arith.addf %7, %9 : vector<128x128xf32>
    %11 = math.tanh %10 : vector<128x128xf32>
    %c0_10 = arith.constant 0 : index
    %c0_11 = arith.constant 0 : index
    %12 = vector.load %arg6[%c0_10, %c0_11] : memref<128x128xf32, #tpu.memory_space<vmem>>, vector<128x128xf32>
    %cst_12 = arith.constant dense<0.000000e+00> : vector<128x128xf32>
    %13 = tpu.matmul %12, %11, %cst_12 {dimension_numbers = #tpu.dot_dimension_numbers<[1], [0], [0], [1], [0, 0, 1, 1], [], []>} : vector<128x128xf32>, vector<128x128xf32>, vector<128x128xf32> -> vector<128x128xf32>
    %c0_13 = arith.constant 0 : index
    %c0_14 = arith.constant 0 : index
    %14 = vector.load %arg7[%c0_13, %c0_14] : memref<128x1xf32, #tpu.memory_space<vmem>>, vector<128x1xf32>
    %15 = vector.broadcast %14 : vector<128x1xf32> to vector<128x128xf32>
    %16 = arith.addf %13, %15 : vector<128x128xf32>
    %17 = math.tanh %16 : vector<128x128xf32>
    %c0_15 = arith.constant 0 : index
    %c0_16 = arith.constant 0 : index
    %18 = vector.load %arg8[%c0_15, %c0_16] : memref<8x128xf32, #tpu.memory_space<vmem>>, vector<8x128xf32>
    %cst_17 = arith.constant dense<0.000000e+00> : vector<8x128xf32>
    %19 = tpu.matmul %18, %17, %cst_17 {dimension_numbers = #tpu.dot_dimension_numbers<[1], [0], [0], [1], [0, 0, 1, 1], [], []>} : vector<8x128xf32>, vector<128x128xf32>, vector<8x128xf32> -> vector<8x128xf32>
    %c0_18 = arith.constant 0 : index
    %c0_19 = arith.constant 0 : index
    %20 = vector.load %arg9[%c0_18, %c0_19] : memref<8x1xf32, #tpu.memory_space<vmem>>, vector<8x1xf32>
    %21 = vector.broadcast %20 : vector<8x1xf32> to vector<8x128xf32>
    %22 = arith.addf %19, %21 : vector<8x128xf32>
    %c0_20 = arith.constant 0 : index
    %c0_21 = arith.constant 0 : index
    %23 = vector.load %arg10[%c0_20, %c0_21] : memref<8x128xf32, #tpu.memory_space<vmem>>, vector<8x128xf32>
    tpu.vector_store %arg10[%c0_20, %c0_21], %22 {strides = array<i32>} : memref<8x128xf32, #tpu.memory_space<vmem>>, vector<8x128xf32>,
    return
  }
  func.func @transform_0(%arg0: i32) -> (i32, i32) {
    %c0_i32 = arith.constant 0 : i32
    %c0_i32_0 = arith.constant 0 : i32
    return %c0_i32, %arg0 : i32, i32
  }
  func.func @transform_1(%arg0: i32) -> (i32, i32) {
    %c0_i32 = arith.constant 0 : i32
    %c0_i32_0 = arith.constant 0 : i32
    %c0_i32_1 = arith.constant 0 : i32
    return %c0_i32, %c0_i32_0 : i32, i32
  }
  func.func @transform_2(%arg0: i32) -> (i32, i32) {
    %c0_i32 = arith.constant 0 : i32
    %c0_i32_0 = arith.constant 0 : i32
    %c0_i32_1 = arith.constant 0 : i32
    return %c0_i32, %c0_i32_0 : i32, i32
  }
  func.func @transform_3(%arg0: i32) -> (i32, i32) {
    %c0_i32 = arith.constant 0 : i32
    %c0_i32_0 = arith.constant 0 : i32
    %c0_i32_1 = arith.constant 0 : i32
    return %c0_i32, %c0_i32_0 : i32, i32
  }
  func.func @transform_4(%arg0: i32) -> (i32, i32) {
    %c0_i32 = arith.constant 0 : i32
    %c0_i32_0 = arith.constant 0 : i32
    %c0_i32_1 = arith.constant 0 : i32
    return %c0_i32, %c0_i32_0 : i32, i32
  }
  func.func @transform_5(%arg0: i32) -> (i32, i32) {
    %c0_i32 = arith.constant 0 : i32
    %c0_i32_0 = arith.constant 0 : i32
    %c0_i32_1 = arith.constant 0 : i32
    return %c0_i32, %c0_i32_0 : i32, i32
  }
  func.func @transform_6(%arg0: i32) -> (i32, i32) {
    %c0_i32 = arith.constant 0 : i32
    %c0_i32_0 = arith.constant 0 : i32
    %c0_i32_1 = arith.constant 0 : i32
    return %c0_i32, %c0_i32_0 : i32, i32
  }
  func.func @transform_7(%arg0: i32) -> (i32, i32) {
    %c0_i32 = arith.constant 0 : i32
    %c0_i32_0 = arith.constant 0 : i32
    %c0_i32_1 = arith.constant 0 : i32
    return %c0_i32, %c0_i32_0 : i32, i32
  }
  func.func @transform_8(%arg0: i32) -> (i32, i32) {
    %c0_i32 = arith.constant 0 : i32
    %c0_i32_0 = arith.constant 0 : i32
    %c0_i32_1 = arith.constant 0 : i32
    return %c0_i32, %c0_i32_0 : i32, i32
  }
  func.func @transform_9(%arg0: i32) -> (i32, i32) {
    %c0_i32 = arith.constant 0 : i32
    %c0_i32_0 = arith.constant 0 : i32
    return %c0_i32, %arg0 : i32, i32
  }
}

</mosaic_0001>

<llo_original>
// kernel: tpu_custom_call.1
$region0: #{tpu_custom_call.1}
  #allocation0 [shape = 'u32[]', space=smem, size = 0x4, offset = 0x4, fixed_abs, tag = 'smem constant byte address 0x4 - core index']
  #allocation1 [shape = 'u32[72,128]{1,0:T(1,128)}', space=vmem, size = 0x9000, scoped, tag = 'internal scratch']
  %s0 = inlined_call_operand.vmem [shape: f32[8,128], index: 0, kind: input, shape index: {}]
  %s1 = inlined_call_operand.vmem [shape: f32[128,8], index: 1, kind: input, shape index: {}]
  %s2 = inlined_call_operand.vmem [shape: f32[128,1], index: 2, kind: input, shape index: {}]
  %s3 = inlined_call_operand.vmem [shape: f32[128,128], index: 3, kind: input, shape index: {}]
  %s4 = inlined_call_operand.vmem [shape: f32[128,1], index: 4, kind: input, shape index: {}]
  %s5 = inlined_call_operand.vmem [shape: f32[128,128], index: 5, kind: input, shape index: {}]
  %s6 = inlined_call_operand.vmem [shape: f32[128,1], index: 6, kind: input, shape index: {}]
  %s7 = inlined_call_operand.vmem [shape: f32[8,128], index: 7, kind: input, shape index: {}]
  %s8 = inlined_call_operand.vmem [shape: f32[8,1], index: 8, kind: input, shape index: {}]
  %s9 = inlined_call_operand.hbm [shape: f32[8,128], index: 9, kind: output, shape index: {}]
  %s10 = sld [smem:[#allocation0]]
  $region46: #{tpu_custom_call.1} parent=0
    _
  %s12 = ssub.s32 1, %s10
  %s13 = scalar_select 0, %s12, %s10
  $region1: #{tpu_custom_call.1} parent=0
    #allocation2 [shape = 'u8[4096]{0}', space=vmem, size = 0x1000, scoped, tag = 'output window, operand 0, single buffered']
    #allocation3 [shape = 's32[1]{0}', space=sflag, size = 0x4, scoped, tag = 'scoped memory for tpu_custom_call.1']
    %14 = vsyncpa [#allocation3], 0
    // Predicated region
    $region2: #{tpu_custom_call.1} parent=1 // pred_check
      _
    $region3: #{tpu_custom_call.1} parent=1 // pred_check_branch
      %16 = sbr.rel (0) target = $region5
    $region4: #{tpu_custom_call.1} parent=1 // pred_region
      _
    $region5: #{tpu_custom_call.1} parent=1 // pred_fallthru
      _
    // Predicated region
    $region6: #{tpu_custom_call.1} parent=1 // pred_check
      _
    $region7: #{tpu_custom_call.1} parent=1 // pred_check_branch
      %18 = sbr.rel (0) target = $region9
    $region8: #{tpu_custom_call.1} parent=1 // pred_region
      _
    $region9: #{tpu_custom_call.1} parent=1 // pred_fallthru
      _
    // Predicated region
    $region10: #{tpu_custom_call.1} parent=1 // pred_check
      _
    $region11: #{tpu_custom_call.1} parent=1 // pred_check_branch
      %20 = sbr.rel (0) target = $region13
    $region12: #{tpu_custom_call.1} parent=1 // pred_region
      _
    $region13: #{tpu_custom_call.1} parent=1 // pred_fallthru
      _
    // Predicated region
    $region14: #{tpu_custom_call.1} parent=1 // pred_check
      _
    $region15: #{tpu_custom_call.1} parent=1 // pred_check_branch
      %22 = sbr.rel (0) target = $region17
    $region16: #{tpu_custom_call.1} parent=1 // pred_region
      _
    $region17: #{tpu_custom_call.1} parent=1 // pred_fallthru
      _
    // Predicated region
    $region18: #{tpu_custom_call.1} parent=1 // pred_check
      _
    $region19: #{tpu_custom_call.1} parent=1 // pred_check_branch
      %24 = sbr.rel (0) target = $region21
    $region20: #{tpu_custom_call.1} parent=1 // pred_region
      _
    $region21: #{tpu_custom_call.1} parent=1 // pred_fallthru
      _
    // Predicated region
    $region22: #{tpu_custom_call.1} parent=1 // pred_check
      _
    $region23: #{tpu_custom_call.1} parent=1 // pred_check_branch
      %26 = sbr.rel (0) target = $region25
    $region24: #{tpu_custom_call.1} parent=1 // pred_region
      _
    $region25: #{tpu_custom_call.1} parent=1 // pred_fallthru
      _
    // Predicated region
    $region26: #{tpu_custom_call.1} parent=1 // pred_check
      _
    $region27: #{tpu_custom_call.1} parent=1 // pred_check_branch
      %28 = sbr.rel (0) target = $region29
    $region28: #{tpu_custom_call.1} parent=1 // pred_region
      _
    $region29: #{tpu_custom_call.1} parent=1 // pred_fallthru
      _
    // Predicated region
    $region30: #{tpu_custom_call.1} parent=1 // pred_check
      _
    $region31: #{tpu_custom_call.1} parent=1 // pred_check_branch
      %30 = sbr.rel (0) target = $region33
    $region32: #{tpu_custom_call.1} parent=1 // pred_region
      _
    $region33: #{tpu_custom_call.1} parent=1 // pred_fallthru
      _
    // Predicated region
    $region34: #{tpu_custom_call.1} parent=1 // pred_check
      _
    $region35: #{tpu_custom_call.1} parent=1 // pred_check_branch
      %32 = sbr.rel (0) target = $region37
    $region36: #{tpu_custom_call.1} parent=1 // pred_region
      _
    $region37: #{tpu_custom_call.1} parent=1 // pred_fallthru
      _
    %v33 = vld [vmem:[%s1] sm:$0xff]
    %v34 = vld [vmem:[%s1 + $0x8] sm:$0xff]
    %v35 = vld [vmem:[%s1 + $0x10] sm:$0xff]
    %v36 = vld [vmem:[%s1 + $0x18] sm:$0xff]
    %v37 = vld [vmem:[%s1 + $0x20] sm:$0xff]
    %v38 = vld [vmem:[%s1 + $0x28] sm:$0xff]
    %v39 = vld [vmem:[%s1 + $0x30] sm:$0xff]
    %v40 = vld [vmem:[%s1 + $0x38] sm:$0xff]
    %v41 = vld [vmem:[%s1 + $0x40] sm:$0xff]
    %v42 = vld [vmem:[%s1 + $0x48] sm:$0xff]
    %v43 = vld [vmem:[%s1 + $0x50] sm:$0xff]
    %v44 = vld [vmem:[%s1 + $0x58] sm:$0xff]
    %v45 = vld [vmem:[%s1 + $0x60] sm:$0xff]
    %v46 = vld [vmem:[%s1 + $0x68] sm:$0xff]
    %v47 = vld [vmem:[%s1 + $0x70] sm:$0xff]
    %v48 = vld [vmem:[%s1 + $0x78] sm:$0xff]
    %v49 = vld [vmem:[%s0] sm:$0xff]
    %v50 = vld [vmem:[%s2] sm:$0xff]
    %v51 = vld [vmem:[%s2 + $0x8] sm:$0xff]
    %v52 = vld [vmem:[%s2 + $0x10] sm:$0xff]
    %v53 = vld [vmem:[%s2 + $0x18] sm:$0xff]
    %v54 = vld [vmem:[%s2 + $0x20] sm:$0xff]
    %v55 = vld [vmem:[%s2 + $0x28] sm:$0xff]
    %v56 = vld [vmem:[%s2 + $0x30] sm:$0xff]
    %v57 = vld [vmem:[%s2 + $0x38] sm:$0xff]
    %v58 = vld [vmem:[%s2 + $0x40] sm:$0xff]
    %v59 = vld [vmem:[%s2 + $0x48] sm:$0xff]
    %v60 = vld [vmem:[%s2 + $0x50] sm:$0xff]
    %v61 = vld [vmem:[%s2 + $0x58] sm:$0xff]
    %v62 = vld [vmem:[%s2 + $0x60] sm:$0xff]
    %v63 = vld [vmem:[%s2 + $0x68] sm:$0xff]
    %v64 = vld [vmem:[%s2 + $0x70] sm:$0xff]
    %v65 = vld [vmem:[%s2 + $0x78] sm:$0xff]
    %67 = vset.pattern.permute.xlu0 0
    %68 = vperm.xlu0 %67, %v50
    %v69 = vpop.permute.xlu0 %68
    %72 = vset.pattern.permute.xlu0 0
    %73 = vperm.xlu0 %72, %v51
    %v74 = vpop.permute.xlu0 %73
    %77 = vset.pattern.permute.xlu0 0
    %78 = vperm.xlu0 %77, %v52
    %v79 = vpop.permute.xlu0 %78
    %82 = vset.pattern.permute.xlu0 0
    %83 = vperm.xlu0 %82, %v53
    %v84 = vpop.permute.xlu0 %83
    %87 = vset.pattern.permute.xlu0 0
    %88 = vperm.xlu0 %87, %v54
    %v89 = vpop.permute.xlu0 %88
    %92 = vset.pattern.permute.xlu0 0
    %93 = vperm.xlu0 %92, %v55
    %v94 = vpop.permute.xlu0 %93
    %97 = vset.pattern.permute.xlu0 0
    %98 = vperm.xlu0 %97, %v56
    %v99 = vpop.permute.xlu0 %98
    %102 = vset.pattern.permute.xlu0 0
    %103 = vperm.xlu0 %102, %v57
    %v104 = vpop.permute.xlu0 %103
    %107 = vset.pattern.permute.xlu0 0
    %108 = vperm.xlu0 %107, %v58
    %v109 = vpop.permute.xlu0 %108
    %112 = vset.pattern.permute.xlu0 0
    %113 = vperm.xlu0 %112, %v59
    %v114 = vpop.permute.xlu0 %113
    %117 = vset.pattern.permute.xlu0 0
    %118 = vperm.xlu0 %117, %v60
    %v119 = vpop.permute.xlu0 %118
    %122 = vset.pattern.permute.xlu0 0
    %123 = vperm.xlu0 %122, %v61
    %v124 = vpop.permute.xlu0 %123
    %127 = vset.pattern.permute.xlu0 0
    %128 = vperm.xlu0 %127, %v62
    %v129 = vpop.permute.xlu0 %128
    %132 = vset.pattern.permute.xlu0 0
    %133 = vperm.xlu0 %132, %v63
    %v134 = vpop.permute.xlu0 %133
    %137 = vset.pattern.permute.xlu0 0
    %138 = vperm.xlu0 %137, %v64
    %v139 = vpop.permute.xlu0 %138
    %142 = vset.pattern.permute.xlu0 0
    %143 = vperm.xlu0 %142, %v65
    %v144 = vpop.permute.xlu0 %143
    %vm146 = vcmask 64512
    %v148 = vsel %vm146, %v33, 0
    %v151 = vsel %vm146, %v34, 0
    %v154 = vsel %vm146, %v35, 0
    %v157 = vsel %vm146, %v36, 0
    %v160 = vsel %vm146, %v37, 0
    %v163 = vsel %vm146, %v38, 0
    %v166 = vsel %vm146, %v39, 0
    %v169 = vsel %vm146, %v40, 0
    %v172 = vsel %vm146, %v41, 0
    %v175 = vsel %vm146, %v42, 0
    %v178 = vsel %vm146, %v43, 0
    %v181 = vsel %vm146, %v44, 0
    %v184 = vsel %vm146, %v45, 0
    %v187 = vsel %vm146, %v46, 0
    %v190 = vsel %vm146, %v47, 0
    %v193 = vsel %vm146, %v48, 0
    %195 = vmatpush.msra.mxu0 0.0
    %196 = vmatpush.msra.mxu0 0.0
    %197 = vmatpush.msra.mxu0 0.0
    %198 = vmatpush.msra.mxu0 0.0
    %199 = vmatpush.msra.mxu0 0.0
    %200 = vmatpush.msra.mxu0 0.0
    %201 = vmatpush.msra.mxu0 0.0
    %202 = vmatpush.msra.mxu0 0.0
    %203 = vmatpush.msra.mxu0 0.0
    %204 = vmatpush.msra.mxu0 0.0
    %205 = vmatpush.msra.mxu0 0.0
    %206 = vmatpush.msra.mxu0 0.0
    %207 = vmatpush.msra.mxu0 0.0
    %208 = vmatpush.msra.mxu0 0.0
    %209 = vmatpush.msra.mxu0 0.0
    %210 = vmatpush.msra.mxu0 %v49
    %211 = vmatmul.f32.gmra.mxu0 %v148
    %v212 = vpop.f32.mrf.mxu0
    %v213 = vadd.f32 %v69, %v212
    %214 = vmatmul.f32.gmra.mxu0 %v151
    %v215 = vpop.f32.mrf.mxu0
    %v216 = vadd.f32 %v74, %v215
    %217 = vmatmul.f32.gmra.mxu0 %v154
    %v218 = vpop.f32.mrf.mxu0
    %v219 = vadd.f32 %v79, %v218
    %220 = vmatmul.f32.gmra.mxu0 %v157
    %v221 = vpop.f32.mrf.mxu0
    %v222 = vadd.f32 %v84, %v221
    %223 = vmatmul.f32.gmra.mxu0 %v160
    %v224 = vpop.f32.mrf.mxu0
    %v225 = vadd.f32 %v89, %v224
    %226 = vmatmul.f32.gmra.mxu0 %v163
    %v227 = vpop.f32.mrf.mxu0
    %v228 = vadd.f32 %v94, %v227
    %229 = vmatmul.f32.gmra.mxu0 %v166
    %v230 = vpop.f32.mrf.mxu0
    %v231 = vadd.f32 %v99, %v230
    %232 = vmatmul.f32.gmra.mxu0 %v169
    %v233 = vpop.f32.mrf.mxu0
    %v234 = vadd.f32 %v104, %v233
    %235 = vmatmul.f32.gmra.mxu0 %v172
    %v236 = vpop.f32.mrf.mxu0
    %v237 = vadd.f32 %v109, %v236
    %238 = vmatmul.f32.gmra.mxu0 %v175
    %v239 = vpop.f32.mrf.mxu0
    %v240 = vadd.f32 %v114, %v239
    %241 = vmatmul.f32.gmra.mxu0 %v178
    %v242 = vpop.f32.mrf.mxu0
    %v243 = vadd.f32 %v119, %v242
    %244 = vmatmul.f32.gmra.mxu0 %v181
    %v245 = vpop.f32.mrf.mxu0
    %v246 = vadd.f32 %v124, %v245
    %247 = vmatmul.f32.gmra.mxu0 %v184
    %v248 = vpop.f32.mrf.mxu0
    %v249 = vadd.f32 %v129, %v248
    %250 = vmatmul.f32.gmra.mxu0 %v187
    %v251 = vpop.f32.mrf.mxu0
    %v252 = vadd.f32 %v134, %v251
    %253 = vmatmul.f32.gmra.mxu0 %v190
    %v254 = vpop.f32.mrf.mxu0
    %v255 = vadd.f32 %v139, %v254
    %256 = vmatmul.f32.gmra.mxu0 %v193
    %v257 = vpop.f32.mrf.mxu0
    %v258 = vadd.f32 %v144, %v257
    %259 = vdwg.mxu0
    %v260 = vld [vmem:[%s3] sm:$0xff]
    %v261 = vld [vmem:[%s3 + $0x8] sm:$0xff]
    %v262 = vld [vmem:[%s3 + $0x10] sm:$0xff]
    %v263 = vld [vmem:[%s3 + $0x18] sm:$0xff]
    %v264 = vld [vmem:[%s3 + $0x20] sm:$0xff]
    %v265 = vld [vmem:[%s3 + $0x28] sm:$0xff]
    %v266 = vld [vmem:[%s3 + $0x30] sm:$0xff]
    %v267 = vld [vmem:[%s3 + $0x38] sm:$0xff]
    %v268 = vld [vmem:[%s3 + $0x40] sm:$0xff]
    %v269 = vld [vmem:[%s3 + $0x48] sm:$0xff]
    %v270 = vld [vmem:[%s3 + $0x50] sm:$0xff]
    %v271 = vld [vmem:[%s3 + $0x58] sm:$0xff]
    %v272 = vld [vmem:[%s3 + $0x60] sm:$0xff]
    %v273 = vld [vmem:[%s3 + $0x68] sm:$0xff]
    %v274 = vld [vmem:[%s3 + $0x70] sm:$0xff]
    %v275 = vld [vmem:[%s3 + $0x78] sm:$0xff]
    %v276 = vld [vmem:[%s4] sm:$0xff]
    %v277 = vld [vmem:[%s4 + $0x8] sm:$0xff]
    %v278 = vld [vmem:[%s4 + $0x10] sm:$0xff]
    %v279 = vld [vmem:[%s4 + $0x18] sm:$0xff]
    %v280 = vld [vmem:[%s4 + $0x20] sm:$0xff]
    %v281 = vld [vmem:[%s4 + $0x28] sm:$0xff]
    %v282 = vld [vmem:[%s4 + $0x30] sm:$0xff]
    %v283 = vld [vmem:[%s4 + $0x38] sm:$0xff]
    %v284 = vld [vmem:[%s4 + $0x40] sm:$0xff]
    %v285 = vld [vmem:[%s4 + $0x48] sm:$0xff]
    %v286 = vld [vmem:[%s4 + $0x50] sm:$0xff]
    %v287 = vld [vmem:[%s4 + $0x58] sm:$0xff]
    %v288 = vld [vmem:[%s4 + $0x60] sm:$0xff]
    %v289 = vld [vmem:[%s4 + $0x68] sm:$0xff]
    %v290 = vld [vmem:[%s4 + $0x70] sm:$0xff]
    %v291 = vld [vmem:[%s4 + $0x78] sm:$0xff]
    %293 = vset.pattern.permute.xlu0 0
    %294 = vperm.xlu0 %293, %v276
    %v295 = vpop.permute.xlu0 %294
    %298 = vset.pattern.permute.xlu0 0
    %299 = vperm.xlu0 %298, %v277
    %v300 = vpop.permute.xlu0 %299
    %303 = vset.pattern.permute.xlu0 0
    %304 = vperm.xlu0 %303, %v278
    %v305 = vpop.permute.xlu0 %304
    %308 = vset.pattern.permute.xlu0 0
    %309 = vperm.xlu0 %308, %v279
    %v310 = vpop.permute.xlu0 %309
    %313 = vset.pattern.permute.xlu0 0
    %314 = vperm.xlu0 %313, %v280
    %v315 = vpop.permute.xlu0 %314
    %318 = vset.pattern.permute.xlu0 0
    %319 = vperm.xlu0 %318, %v281
    %v320 = vpop.permute.xlu0 %319
    %323 = vset.pattern.permute.xlu0 0
    %324 = vperm.xlu0 %323, %v282
    %v325 = vpop.permute.xlu0 %324
    %328 = vset.pattern.permute.xlu0 0
    %329 = vperm.xlu0 %328, %v283
    %v330 = vpop.permute.xlu0 %329
    %333 = vset.pattern.permute.xlu0 0
    %334 = vperm.xlu0 %333, %v284
    %v335 = vpop.permute.xlu0 %334
    %338 = vset.pattern.permute.xlu0 0
    %339 = vperm.xlu0 %338, %v285
    %v340 = vpop.permute.xlu0 %339
    %343 = vset.pattern.permute.xlu0 0
    %344 = vperm.xlu0 %343, %v286
    %v345 = vpop.permute.xlu0 %344
    %348 = vset.pattern.permute.xlu0 0
    %349 = vperm.xlu0 %348, %v287
    %v350 = vpop.permute.xlu0 %349
    %353 = vset.pattern.permute.xlu0 0
    %354 = vperm.xlu0 %353, %v288
    %v355 = vpop.permute.xlu0 %354
    %358 = vset.pattern.permute.xlu0 0
    %359 = vperm.xlu0 %358, %v289
    %v360 = vpop.permute.xlu0 %359
    %363 = vset.pattern.permute.xlu0 0
    %364 = vperm.xlu0 %363, %v290
    %v365 = vpop.permute.xlu0 %364
    %368 = vset.pattern.permute.xlu0 0
    %369 = vperm.xlu0 %368, %v291
    %v370 = vpop.permute.xlu0 %369
    %372 = vmatpush.msra.mxu0 %v258
    %373 = vmatpush.msra.mxu0 %v255
    %374 = vmatpush.msra.mxu0 %v252
    %375 = vmatpush.msra.mxu0 %v249
    %376 = vmatpush.msra.mxu0 %v246
    %377 = vmatpush.msra.mxu0 %v243
    %378 = vmatpush.msra.mxu0 %v240
    %379 = vmatpush.msra.mxu0 %v237
    %380 = vmatpush.msra.mxu0 %v234
    %381 = vmatpush.msra.mxu0 %v231
    %382 = vmatpush.msra.mxu0 %v228
    %383 = vmatpush.msra.mxu0 %v225
    %384 = vmatpush.msra.mxu0 %v222
    %385 = vmatpush.msra.mxu0 %v219
    %386 = vmatpush.msra.mxu0 %v216
    %387 = vmatpush.msra.mxu0 %v213
    %388 = vmatmul.f32.gmra.mxu0 %v260
    %v389 = vpop.f32.mrf.mxu0
    %v390 = vadd.f32 %v295, %v389
    %391 = vmatmul.f32.gmra.mxu0 %v261
    %v392 = vpop.f32.mrf.mxu0
    %v393 = vadd.f32 %v300, %v392
    %394 = vmatmul.f32.gmra.mxu0 %v262
    %v395 = vpop.f32.mrf.mxu0
    %v396 = vadd.f32 %v305, %v395
    %397 = vmatmul.f32.gmra.mxu0 %v263
    %v398 = vpop.f32.mrf.mxu0
    %v399 = vadd.f32 %v310, %v398
    %400 = vmatmul.f32.gmra.mxu0 %v264
    %v401 = vpop.f32.mrf.mxu0
    %v402 = vadd.f32 %v315, %v401
    %403 = vmatmul.f32.gmra.mxu0 %v265
    %v404 = vpop.f32.mrf.mxu0
    %v405 = vadd.f32 %v320, %v404
    %406 = vmatmul.f32.gmra.mxu0 %v266
    %v407 = vpop.f32.mrf.mxu0
    %v408 = vadd.f32 %v325, %v407
    %409 = vmatmul.f32.gmra.mxu0 %v267
    %v410 = vpop.f32.mrf.mxu0
    %v411 = vadd.f32 %v330, %v410
    %412 = vmatmul.f32.gmra.mxu0 %v268
    %v413 = vpop.f32.mrf.mxu0
    %v414 = vadd.f32 %v335, %v413
    %415 = vmatmul.f32.gmra.mxu0 %v269
    %v416 = vpop.f32.mrf.mxu0
    %v417 = vadd.f32 %v340, %v416
    %418 = vmatmul.f32.gmra.mxu0 %v270
    %v419 = vpop.f32.mrf.mxu0
    %v420 = vadd.f32 %v345, %v419
    %421 = vmatmul.f32.gmra.mxu0 %v271
    %v422 = vpop.f32.mrf.mxu0
    %v423 = vadd.f32 %v350, %v422
    %424 = vmatmul.f32.gmra.mxu0 %v272
    %v425 = vpop.f32.mrf.mxu0
    %v426 = vadd.f32 %v355, %v425
    %427 = vmatmul.f32.gmra.mxu0 %v273
    %v428 = vpop.f32.mrf.mxu0
    %v429 = vadd.f32 %v360, %v428
    %430 = vmatmul.f32.gmra.mxu0 %v274
    %v431 = vpop.f32.mrf.mxu0
    %v432 = vadd.f32 %v365, %v431
    %433 = vmatmul.f32.gmra.mxu0 %v275
    %v434 = vpop.f32.mrf.mxu0
    %v435 = vadd.f32 %v370, %v434
    %436 = vdwg.mxu0
    %v437 = vtanh.pop %v390
    %v438 = vtanh.pop %v393
    %v439 = vtanh.pop %v396
    %v440 = vtanh.pop %v399
    %v441 = vtanh.pop %v402
    %v442 = vtanh.pop %v405
    %v443 = vtanh.pop %v408
    %v444 = vtanh.pop %v411
    %v445 = vtanh.pop %v414
    %v446 = vtanh.pop %v417
    %v447 = vtanh.pop %v420
    %v448 = vtanh.pop %v423
    %v449 = vtanh.pop %v426
    %v450 = vtanh.pop %v429
    %v451 = vtanh.pop %v432
    %v452 = vtanh.pop %v435
    %v453 = vld [vmem:[%s5] sm:$0xff]
    %v454 = vld [vmem:[%s5 + $0x8] sm:$0xff]
    %v455 = vld [vmem:[%s5 + $0x10] sm:$0xff]
    %v456 = vld [vmem:[%s5 + $0x18] sm:$0xff]
    %v457 = vld [vmem:[%s5 + $0x20] sm:$0xff]
    %v458 = vld [vmem:[%s5 + $0x28] sm:$0xff]
    %v459 = vld [vmem:[%s5 + $0x30] sm:$0xff]
    %v460 = vld [vmem:[%s5 + $0x38] sm:$0xff]
    %v461 = vld [vmem:[%s5 + $0x40] sm:$0xff]
    %v462 = vld [vmem:[%s5 + $0x48] sm:$0xff]
    %v463 = vld [vmem:[%s5 + $0x50] sm:$0xff]
    %v464 = vld [vmem:[%s5 + $0x58] sm:$0xff]
    %v465 = vld [vmem:[%s5 + $0x60] sm:$0xff]
    %v466 = vld [vmem:[%s5 + $0x68] sm:$0xff]
    %v467 = vld [vmem:[%s5 + $0x70] sm:$0xff]
    %v468 = vld [vmem:[%s5 + $0x78] sm:$0xff]
    %v469 = vld [vmem:[%s6] sm:$0xff]
    %v470 = vld [vmem:[%s6 + $0x8] sm:$0xff]
    %v471 = vld [vmem:[%s6 + $0x10] sm:$0xff]
    %v472 = vld [vmem:[%s6 + $0x18] sm:$0xff]
    %v473 = vld [vmem:[%s6 + $0x20] sm:$0xff]
    %v474 = vld [vmem:[%s6 + $0x28] sm:$0xff]
    %v475 = vld [vmem:[%s6 + $0x30] sm:$0xff]
    %v476 = vld [vmem:[%s6 + $0x38] sm:$0xff]
    %v477 = vld [vmem:[%s6 + $0x40] sm:$0xff]
    %v478 = vld [vmem:[%s6 + $0x48] sm:$0xff]
    %v479 = vld [vmem:[%s6 + $0x50] sm:$0xff]
    %v480 = vld [vmem:[%s6 + $0x58] sm:$0xff]
    %v481 = vld [vmem:[%s6 + $0x60] sm:$0xff]
    %v482 = vld [vmem:[%s6 + $0x68] sm:$0xff]
    %v483 = vld [vmem:[%s6 + $0x70] sm:$0xff]
    %v484 = vld [vmem:[%s6 + $0x78] sm:$0xff]
    %486 = vset.pattern.permute.xlu0 0
    %487 = vperm.xlu0 %486, %v469
    %v488 = vpop.permute.xlu0 %487
    %491 = vset.pattern.permute.xlu0 0
    %492 = vperm.xlu0 %491, %v470
    %v493 = vpop.permute.xlu0 %492
    %496 = vset.pattern.permute.xlu0 0
    %497 = vperm.xlu0 %496, %v471
    %v498 = vpop.permute.xlu0 %497
    %501 = vset.pattern.permute.xlu0 0
    %502 = vperm.xlu0 %501, %v472
    %v503 = vpop.permute.xlu0 %502
    %506 = vset.pattern.permute.xlu0 0
    %507 = vperm.xlu0 %506, %v473
    %v508 = vpop.permute.xlu0 %507
    %511 = vset.pattern.permute.xlu0 0
    %512 = vperm.xlu0 %511, %v474
    %v513 = vpop.permute.xlu0 %512
    %516 = vset.pattern.permute.xlu0 0
    %517 = vperm.xlu0 %516, %v475
    %v518 = vpop.permute.xlu0 %517
    %521 = vset.pattern.permute.xlu0 0
    %522 = vperm.xlu0 %521, %v476
    %v523 = vpop.permute.xlu0 %522
    %526 = vset.pattern.permute.xlu0 0
    %527 = vperm.xlu0 %526, %v477
    %v528 = vpop.permute.xlu0 %527
    %531 = vset.pattern.permute.xlu0 0
    %532 = vperm.xlu0 %531, %v478
    %v533 = vpop.permute.xlu0 %532
    %536 = vset.pattern.permute.xlu0 0
    %537 = vperm.xlu0 %536, %v479
    %v538 = vpop.permute.xlu0 %537
    %541 = vset.pattern.permute.xlu0 0
    %542 = vperm.xlu0 %541, %v480
    %v543 = vpop.permute.xlu0 %542
    %546 = vset.pattern.permute.xlu0 0
    %547 = vperm.xlu0 %546, %v481
    %v548 = vpop.permute.xlu0 %547
    %551 = vset.pattern.permute.xlu0 0
    %552 = vperm.xlu0 %551, %v482
    %v553 = vpop.permute.xlu0 %552
    %556 = vset.pattern.permute.xlu0 0
    %557 = vperm.xlu0 %556, %v483
    %v558 = vpop.permute.xlu0 %557
    %561 = vset.pattern.permute.xlu0 0
    %562 = vperm.xlu0 %561, %v484
    %v563 = vpop.permute.xlu0 %562
    %565 = vmatpush.msra.mxu0 %v452
    %566 = vmatpush.msra.mxu0 %v451
    %567 = vmatpush.msra.mxu0 %v450
    %568 = vmatpush.msra.mxu0 %v449
    %569 = vmatpush.msra.mxu0 %v448
    %570 = vmatpush.msra.mxu0 %v447
    %571 = vmatpush.msra.mxu0 %v446
    %572 = vmatpush.msra.mxu0 %v445
    %573 = vmatpush.msra.mxu0 %v444
    %574 = vmatpush.msra.mxu0 %v443
    %575 = vmatpush.msra.mxu0 %v442
    %576 = vmatpush.msra.mxu0 %v441
    %577 = vmatpush.msra.mxu0 %v440
    %578 = vmatpush.msra.mxu0 %v439
    %579 = vmatpush.msra.mxu0 %v438
    %580 = vmatpush.msra.mxu0 %v437
    %581 = vmatmul.f32.gmra.mxu0 %v453
    %v582 = vpop.f32.mrf.mxu0
    %v583 = vadd.f32 %v488, %v582
    %584 = vmatmul.f32.gmra.mxu0 %v454
    %v585 = vpop.f32.mrf.mxu0
    %v586 = vadd.f32 %v493, %v585
    %587 = vmatmul.f32.gmra.mxu0 %v455
    %v588 = vpop.f32.mrf.mxu0
    %v589 = vadd.f32 %v498, %v588
    %590 = vmatmul.f32.gmra.mxu0 %v456
    %v591 = vpop.f32.mrf.mxu0
    %v592 = vadd.f32 %v503, %v591
    %593 = vmatmul.f32.gmra.mxu0 %v457
    %v594 = vpop.f32.mrf.mxu0
    %v595 = vadd.f32 %v508, %v594
    %596 = vmatmul.f32.gmra.mxu0 %v458
    %v597 = vpop.f32.mrf.mxu0
    %v598 = vadd.f32 %v513, %v597
    %599 = vmatmul.f32.gmra.mxu0 %v459
    %v600 = vpop.f32.mrf.mxu0
    %v601 = vadd.f32 %v518, %v600
    %602 = vmatmul.f32.gmra.mxu0 %v460
    %v603 = vpop.f32.mrf.mxu0
    %v604 = vadd.f32 %v523, %v603
    %605 = vmatmul.f32.gmra.mxu0 %v461
    %v606 = vpop.f32.mrf.mxu0
    %v607 = vadd.f32 %v528, %v606
    %608 = vmatmul.f32.gmra.mxu0 %v462
    %v609 = vpop.f32.mrf.mxu0
    %v610 = vadd.f32 %v533, %v609
    %611 = vmatmul.f32.gmra.mxu0 %v463
    %v612 = vpop.f32.mrf.mxu0
    %v613 = vadd.f32 %v538, %v612
    %614 = vmatmul.f32.gmra.mxu0 %v464
    %v615 = vpop.f32.mrf.mxu0
    %v616 = vadd.f32 %v543, %v615
    %617 = vmatmul.f32.gmra.mxu0 %v465
    %v618 = vpop.f32.mrf.mxu0
    %v619 = vadd.f32 %v548, %v618
    %620 = vmatmul.f32.gmra.mxu0 %v466
    %v621 = vpop.f32.mrf.mxu0
    %v622 = vadd.f32 %v553, %v621
    %623 = vmatmul.f32.gmra.mxu0 %v467
    %v624 = vpop.f32.mrf.mxu0
    %v625 = vadd.f32 %v558, %v624
    %626 = vmatmul.f32.gmra.mxu0 %v468
    %v627 = vpop.f32.mrf.mxu0
    %v628 = vadd.f32 %v563, %v627
    %629 = vdwg.mxu0
    %v630 = vtanh.pop %v583
    %v631 = vtanh.pop %v586
    %v632 = vtanh.pop %v589
    %v633 = vtanh.pop %v592
    %v634 = vtanh.pop %v595
    %v635 = vtanh.pop %v598
    %v636 = vtanh.pop %v601
    %v637 = vtanh.pop %v604
    %v638 = vtanh.pop %v607
    %v639 = vtanh.pop %v610
    %v640 = vtanh.pop %v613
    %v641 = vtanh.pop %v616
    %v642 = vtanh.pop %v619
    %v643 = vtanh.pop %v622
    %v644 = vtanh.pop %v625
    %v645 = vtanh.pop %v628
    %v646 = vld [vmem:[%s7] sm:$0xff]
    %v647 = vld [vmem:[%s8] sm:$0xff]
    %649 = vset.pattern.permute.xlu0 0
    %650 = vperm.xlu0 %649, %v647
    %v651 = vpop.permute.xlu0 %650
    %653 = vmatpush.msra.mxu0 %v645
    %654 = vmatpush.msra.mxu0 %v644
    %655 = vmatpush.msra.mxu0 %v643
    %656 = vmatpush.msra.mxu0 %v642
    %657 = vmatpush.msra.mxu0 %v641
    %658 = vmatpush.msra.mxu0 %v640
    %659 = vmatpush.msra.mxu0 %v639
    %660 = vmatpush.msra.mxu0 %v638
    %661 = vmatpush.msra.mxu0 %v637
    %662 = vmatpush.msra.mxu0 %v636
    %663 = vmatpush.msra.mxu0 %v635
    %664 = vmatpush.msra.mxu0 %v634
    %665 = vmatpush.msra.mxu0 %v633
    %666 = vmatpush.msra.mxu0 %v632
    %667 = vmatpush.msra.mxu0 %v631
    %668 = vmatpush.msra.mxu0 %v630
    %669 = vmatmul.f32.gmra.mxu0 %v646
    %v670 = vpop.f32.mrf.mxu0
    %v671 = vadd.f32 %v651, %v670
    %672 = vdwg.mxu0
    %673 = vst [vmem:[#allocation2] sm:$0xff] %v671
    // Predicated region
    $region38: #{tpu_custom_call.1} parent=1 // pred_check
      _
    $region39: #{tpu_custom_call.1} parent=1 // pred_check_branch
      %675 = sbr.rel (0) target = $region41
    $region40: #{tpu_custom_call.1} parent=1 // pred_region
      %677 = vsyncadd [#allocation3], 0
      %s679 = sshll.u32 [#allocation2], 4
      %s680 = int_to_ptr.vmem [resolvable:$true] %s679
      %s681 = sshll.u32 %s9, 4
      %s682 = int_to_ptr.hbm [resolvable:$true] %s681
      %684 = dma.vmem_to_hbm [thread:$0]  %s680, 128, %s682, [#allocation3]
    $region41: #{tpu_custom_call.1} parent=1 // pred_fallthru
      _
    // Predicated region
    $region42: #{tpu_custom_call.1} parent=1 // pred_check
      _
    $region43: #{tpu_custom_call.1} parent=1 // pred_check_branch
      %686 = sbr.rel (0) target = $region45
    $region44: #{tpu_custom_call.1} parent=1 // pred_region
      %688 = dma.done [#allocation3], 128
    $region45: #{tpu_custom_call.1} parent=1 // pred_fallthru
      _
    %689 = vsyncpa [#allocation3], 1

</llo_original>
